<compile_context>
chip_gen: v7x
topology: tpu7x:2x2x1
jax: 0.10.0
libtpu: 0.0.40
codegen_flags: <defaults>
</compile_context>

<pallas_src>
import jax
import jax.numpy as jnp
from jax import lax
from jax.experimental import pallas as pl
from jax.experimental.pallas import tpu as pltpu


def _lstm_seq_kernel(gin_ref, whh_ref, o_ref, hN_ref, cN_ref):
    """Whole LSTM recurrence in one kernel invocation.

    gin_ref: (T, B, 4H)  precomputed input gates (e @ W_ih.T + b_ih + b_hh),
                         with g-gate lanes pre-scaled by 2.
    whh_ref: (H, 4H)     hidden->gates weight (pre-transposed, g lanes x2).
    o_ref  : (T//pack, B, pack*H)  per-step hidden outputs, pack timesteps per
                         lane-dense slab.
    hN_ref : (B, H)      final hidden state.
    cN_ref : (B, H)      final cell state.
    """
    T, B, _ = gin_ref.shape
    H = hN_ref.shape[-1]
    n_groups, _, pack_h = o_ref.shape
    pack = pack_h // H

    whh = whh_ref[...]          # (H, 4H): resident in vregs for the whole recurrence
    gin = gin_ref[...]          # (T, B, 4H): tiny; avoids per-step sublane-sparse loads

    h = jnp.zeros((B, H), jnp.float32)
    c = jnp.zeros((B, H), jnp.float32)

    # Full static unroll (T is small); only the h @ W_hh^T matmul and the
    # elementwise gate math sit on the serial dependency chain.
    for g in range(n_groups):
        slab = []
        for j in range(pack):
            t = g * pack + j
            gates = gin[t] + jnp.dot(h, whh, preferred_element_type=jnp.float32)  # (B, 4H)

            # Single full-vreg sigmoid; g lanes were pre-scaled by 2, so
            # tanh(x) = 2*sigmoid(2x) - 1 is recovered with two VPU ops.
            act = jax.nn.sigmoid(gates)
            i_g = act[:, 0 * H:1 * H]
            f_g = act[:, 1 * H:2 * H]
            g_g = 2.0 * act[:, 2 * H:3 * H] - 1.0
            o_g = act[:, 3 * H:4 * H]

            c = f_g * c + i_g * g_g
            h = o_g * jnp.tanh(c)
            slab.append(h)

        # Lane-dense store: pack `pack` timesteps into one (B, pack*H) slab.
        o_ref[g] = jnp.concatenate(slab, axis=-1).astype(o_ref.dtype)

    # Final states stored exactly once.
    hN_ref[...] = h.astype(hN_ref.dtype)
    cN_ref[...] = c.astype(cN_ref.dtype)


def encoder_forward(x_seq, embedding, w_ih, w_hh, b_ih, b_hh):
    """Replicates Encoder.forward.

    x_seq    : (T, B) int32 token ids
    embedding: (V, E) float32
    w_ih     : (4H, E), w_hh: (4H, H), b_ih/b_hh: (4H,)   (PyTorch LSTMCell shapes)
    returns  : (o_seq (T,B,H), h (B,H), c (B,H))
    """
    T, B = x_seq.shape
    H = w_hh.shape[1]

    # Hoist the input projection out of the recurrence (plain-JAX glue, like
    # the original embedding lookup): gather embeddings, one fused GEMM + bias.
    e_seq = jnp.take(embedding, x_seq, axis=0)                       # (T, B, E)
    g_in = jnp.einsum("tbe,ge->tbg", e_seq, w_ih) + (b_ih + b_hh)    # (T, B, 4H)

    whh_t = jnp.transpose(w_hh)                                      # (H, 4H)

    # Pre-scale the g-gate lanes [2H,3H) by 2 (exact) so the kernel needs only
    # one sigmoid pass per step: tanh(x) = 2*sigmoid(2x) - 1.
    lane = jnp.arange(4 * H)
    g_scale = jnp.where((lane >= 2 * H) & (lane < 3 * H), 2.0, 1.0).astype(jnp.float32)
    g_in = (g_in * g_scale).astype(jnp.float32)
    whh_t = (whh_t * g_scale).astype(jnp.float32)

    # Lane-dense output packing: pack timesteps so each store is >=128 lanes.
    pack = 1
    if H <= 128 and 128 % H == 0 and T % (128 // H) == 0:
        pack = 128 // H
    n_groups = T // pack

    grid_spec = pltpu.PrefetchScalarGridSpec(
        num_scalar_prefetch=0,
        grid=(1,),
        in_specs=[
            pl.BlockSpec((T, B, 4 * H), lambda i: (0, 0, 0)),        # input gates
            pl.BlockSpec((H, 4 * H), lambda i: (0, 0)),              # W_hh^T (resident)
        ],
        out_specs=[
            pl.BlockSpec((n_groups, B, pack * H), lambda i: (0, 0, 0)),  # packed hidden
            pl.BlockSpec((B, H), lambda i: (0, 0)),                      # final h
            pl.BlockSpec((B, H), lambda i: (0, 0)),                      # final c
        ],
    )

    o_packed, h, c = pl.pallas_call(
        _lstm_seq_kernel,
        grid_spec=grid_spec,
        out_shape=(
            jax.ShapeDtypeStruct((n_groups, B, pack * H), jnp.float32),
            jax.ShapeDtypeStruct((B, H), jnp.float32),
            jax.ShapeDtypeStruct((B, H), jnp.float32),
        ),
        compiler_params=pltpu.CompilerParams(
            dimension_semantics=("arbitrary",),
        ),
    )(g_in, whh_t)

    # Un-interleave packed timesteps back to (T, B, H)  (== torch.stack(o, 0)).
    o_seq = (
        o_packed.reshape(n_groups, B, pack, H)
        .transpose(0, 2, 1, 3)
        .reshape(T, B, H)
    )
    return o_seq, h, c


def _reference_forward(x_seq, embedding, w_ih, w_hh, b_ih, b_hh):
    """Pure-JAX reference (scan) for correctness check."""
    e_seq = jnp.take(embedding, x_seq, axis=0)
    B = x_seq.shape[1]
    H = w_hh.shape[1]

    def step(carry, e):
        h, c = carry
        gates = e @ w_ih.T + b_ih + h @ w_hh.T + b_hh
        i_g = jax.nn.sigmoid(gates[:, 0 * H:1 * H])
        f_g = jax.nn.sigmoid(gates[:, 1 * H:2 * H])
        g_g = jnp.tanh(gates[:, 2 * H:3 * H])
        o_g = jax.nn.sigmoid(gates[:, 3 * H:4 * H])
        c_new = f_g * c + i_g * g_g
        h_new = o_g * jnp.tanh(c_new)
        return (h_new, c_new), h_new

    init = (jnp.zeros((B, H), jnp.float32), jnp.zeros((B, H), jnp.float32))
    (h, c), o_seq = lax.scan(step, init, e_seq)
    return o_seq, h, c


if __name__ == "__main__":
    # Small, deterministic setup.
    vocab_size, d_embed, d_hidden = 20, 32, 32
    T, B = 8, 2

    key = jax.random.PRNGKey(0)
    k_emb, k_wih, k_whh, k_bih, k_bhh, k_x = jax.random.split(key, 6)

    # nn.Embedding ~ N(0,1); nn.LSTMCell ~ U(-1/sqrt(H), 1/sqrt(H))
    embedding = jax.random.normal(k_emb, (vocab_size, d_embed), jnp.float32)
    bound = 1.0 / jnp.sqrt(jnp.float32(d_hidden))
    w_ih = jax.random.uniform(k_wih, (4 * d_hidden, d_embed), jnp.float32, -bound, bound)
    w_hh = jax.random.uniform(k_whh, (4 * d_hidden, d_hidden), jnp.float32, -bound, bound)
    b_ih = jax.random.uniform(k_bih, (4 * d_hidden,), jnp.float32, -bound, bound)
    b_hh = jax.random.uniform(k_bhh, (4 * d_hidden,), jnp.float32, -bound, bound)

    x_seq = jax.random.randint(k_x, (T, B), 0, vocab_size, dtype=jnp.int32)

    o_seq, h, c = encoder_forward(x_seq, embedding, w_ih, w_hh, b_ih, b_hh)
    jax.block_until_ready((o_seq, h, c))

    o_ref, h_ref, c_ref = _reference_forward(x_seq, embedding, w_ih, w_hh, b_ih, b_hh)
    assert o_seq.shape == (T, B, d_hidden)
    assert h.shape == (B, d_hidden) and c.shape == (B, d_hidden)
    assert jnp.allclose(o_seq, o_ref, atol=1e-5), "o_seq mismatch"
    assert jnp.allclose(h, h_ref, atol=1e-5), "h mismatch"
    assert jnp.allclose(c, c_ref, atol=1e-5), "c mismatch"

    print("KERNEL_OK")
</pallas_src>

<mosaic_0001>
module attributes {stable_mosaic.version = 11 : i64} {
  func.func @_lstm_seq_kernel(%arg0: i32, %arg1: memref<8x2x128xf32, #tpu.memory_space<vmem>>, %arg2: memref<32x128xf32, #tpu.memory_space<vmem>>, %arg3: memref<2x2x128xf32, #tpu.memory_space<vmem>>, %arg4: memref<2x32xf32, #tpu.memory_space<vmem>>, %arg5: memref<2x32xf32, #tpu.memory_space<vmem>>) attributes {dimension_semantics = [#tpu.dimension_semantics<arbitrary>], iteration_bounds = array<i64: 1>, scalar_prefetch = 0 : i64, scratch_operands = 0 : i64, tpu.core_type = #tpu.core_type<tc>, window_params = [{pipeline_mode = #tpu.pipeline_mode<synchronous>, transform_indices = @transform_0, window_bounds = array<i64: 8, 2, 128>}, {pipeline_mode = #tpu.pipeline_mode<synchronous>, transform_indices = @transform_1, window_bounds = array<i64: 32, 128>}, {pipeline_mode = #tpu.pipeline_mode<synchronous>, transform_indices = @transform_2, window_bounds = array<i64: 2, 2, 128>}, {pipeline_mode = #tpu.pipeline_mode<synchronous>, transform_indices = @transform_3, window_bounds = array<i64: 2, 32>}, {pipeline_mode = #tpu.pipeline_mode<synchronous>, transform_indices = @transform_4, window_bounds = array<i64: 2, 32>}]} {
    %c0 = arith.constant 0 : index
    %c0_0 = arith.constant 0 : index
    %0 = vector.load %arg2[%c0, %c0_0] : memref<32x128xf32, #tpu.memory_space<vmem>>, vector<32x128xf32>
    %c0_1 = arith.constant 0 : index
    %c0_2 = arith.constant 0 : index
    %c0_3 = arith.constant 0 : index
    %1 = vector.load %arg1[%c0_1, %c0_2, %c0_3] : memref<8x2x128xf32, #tpu.memory_space<vmem>>, vector<8x2x128xf32>
    %cst = arith.constant 0.000000e+00 : f32
    %2 = vector.broadcast %cst : f32 to vector<2x32xf32>
    %cst_4 = arith.constant 0.000000e+00 : f32
    %3 = vector.broadcast %cst_4 : f32 to vector<2x32xf32>
    %4 = vector.extract_strided_slice %1 {offsets = [0, 0, 0], sizes = [1, 2, 128], strides = [1, 1, 1]} : vector<8x2x128xf32> to vector<1x2x128xf32>
    %5 = vector.shape_cast %4 : vector<1x2x128xf32> to vector<2x128xf32>
    %cst_5 = arith.constant dense<0.000000e+00> : vector<2x128xf32>
    %6 = tpu.matmul %2, %0, %cst_5 {dimension_numbers = #tpu.dot_dimension_numbers<[1], [0], [0], [1], [0, 0, 1, 1], [], []>} : vector<2x32xf32>, vector<32x128xf32>, vector<2x128xf32> -> vector<2x128xf32>
    %7 = arith.addf %5, %6 : vector<2x128xf32>
    %8 = arith.negf %7 : vector<2x128xf32>
    %9 = math.exp %8 : vector<2x128xf32>
    %cst_6 = arith.constant 1.000000e+00 : f32
    %10 = vector.broadcast %cst_6 : f32 to vector<2x128xf32>
    %11 = arith.addf %10, %9 : vector<2x128xf32>
    %12 = arith.divf %10, %11 : vector<2x128xf32>
    %13 = vector.extract_strided_slice %12 {offsets = [0, 0], sizes = [2, 32], strides = [1, 1]} : vector<2x128xf32> to vector<2x32xf32>
    %14 = vector.extract_strided_slice %12 {offsets = [0, 32], sizes = [2, 32], strides = [1, 1]} : vector<2x128xf32> to vector<2x32xf32>
    %15 = vector.extract_strided_slice %12 {offsets = [0, 64], sizes = [2, 32], strides = [1, 1]} : vector<2x128xf32> to vector<2x32xf32>
    %cst_7 = arith.constant 2.000000e+00 : f32
    %16 = vector.broadcast %cst_7 : f32 to vector<2x32xf32>
    %17 = arith.mulf %16, %15 : vector<2x32xf32>
    %cst_8 = arith.constant 1.000000e+00 : f32
    %18 = vector.broadcast %cst_8 : f32 to vector<2x32xf32>
    %19 = arith.subf %17, %18 : vector<2x32xf32>
    %20 = vector.extract_strided_slice %12 {offsets = [0, 96], sizes = [2, 32], strides = [1, 1]} : vector<2x128xf32> to vector<2x32xf32>
    %21 = arith.mulf %14, %3 : vector<2x32xf32>
    %22 = arith.mulf %13, %19 : vector<2x32xf32>
    %23 = arith.addf %21, %22 : vector<2x32xf32>
    %24 = math.tanh %23 : vector<2x32xf32>
    %25 = arith.mulf %20, %24 : vector<2x32xf32>
    %26 = vector.extract_strided_slice %1 {offsets = [1, 0, 0], sizes = [1, 2, 128], strides = [1, 1, 1]} : vector<8x2x128xf32> to vector<1x2x128xf32>
    %27 = vector.shape_cast %26 : vector<1x2x128xf32> to vector<2x128xf32>
    %cst_9 = arith.constant dense<0.000000e+00> : vector<2x128xf32>
    %28 = tpu.matmul %25, %0, %cst_9 {dimension_numbers = #tpu.dot_dimension_numbers<[1], [0], [0], [1], [0, 0, 1, 1], [], []>} : vector<2x32xf32>, vector<32x128xf32>, vector<2x128xf32> -> vector<2x128xf32>
    %29 = arith.addf %27, %28 : vector<2x128xf32>
    %30 = arith.negf %29 : vector<2x128xf32>
    %31 = math.exp %30 : vector<2x128xf32>
    %cst_10 = arith.constant 1.000000e+00 : f32
    %32 = vector.broadcast %cst_10 : f32 to vector<2x128xf32>
    %33 = arith.addf %32, %31 : vector<2x128xf32>
    %34 = arith.divf %32, %33 : vector<2x128xf32>
    %35 = vector.extract_strided_slice %34 {offsets = [0, 0], sizes = [2, 32], strides = [1, 1]} : vector<2x128xf32> to vector<2x32xf32>
    %36 = vector.extract_strided_slice %34 {offsets = [0, 32], sizes = [2, 32], strides = [1, 1]} : vector<2x128xf32> to vector<2x32xf32>
    %37 = vector.extract_strided_slice %34 {offsets = [0, 64], sizes = [2, 32], strides = [1, 1]} : vector<2x128xf32> to vector<2x32xf32>
    %cst_11 = arith.constant 2.000000e+00 : f32
    %38 = vector.broadcast %cst_11 : f32 to vector<2x32xf32>
    %39 = arith.mulf %38, %37 : vector<2x32xf32>
    %cst_12 = arith.constant 1.000000e+00 : f32
    %40 = vector.broadcast %cst_12 : f32 to vector<2x32xf32>
    %41 = arith.subf %39, %40 : vector<2x32xf32>
    %42 = vector.extract_strided_slice %34 {offsets = [0, 96], sizes = [2, 32], strides = [1, 1]} : vector<2x128xf32> to vector<2x32xf32>
    %43 = arith.mulf %36, %23 : vector<2x32xf32>
    %44 = arith.mulf %35, %41 : vector<2x32xf32>
    %45 = arith.addf %43, %44 : vector<2x32xf32>
    %46 = math.tanh %45 : vector<2x32xf32>
    %47 = arith.mulf %42, %46 : vector<2x32xf32>
    %48 = vector.extract_strided_slice %1 {offsets = [2, 0, 0], sizes = [1, 2, 128], strides = [1, 1, 1]} : vector<8x2x128xf32> to vector<1x2x128xf32>
    %49 = vector.shape_cast %48 : vector<1x2x128xf32> to vector<2x128xf32>
    %cst_13 = arith.constant dense<0.000000e+00> : vector<2x128xf32>
    %50 = tpu.matmul %47, %0, %cst_13 {dimension_numbers = #tpu.dot_dimension_numbers<[1], [0], [0], [1], [0, 0, 1, 1], [], []>} : vector<2x32xf32>, vector<32x128xf32>, vector<2x128xf32> -> vector<2x128xf32>
    %51 = arith.addf %49, %50 : vector<2x128xf32>
    %52 = arith.negf %51 : vector<2x128xf32>
    %53 = math.exp %52 : vector<2x128xf32>
    %cst_14 = arith.constant 1.000000e+00 : f32
    %54 = vector.broadcast %cst_14 : f32 to vector<2x128xf32>
    %55 = arith.addf %54, %53 : vector<2x128xf32>
    %56 = arith.divf %54, %55 : vector<2x128xf32>
    %57 = vector.extract_strided_slice %56 {offsets = [0, 0], sizes = [2, 32], strides = [1, 1]} : vector<2x128xf32> to vector<2x32xf32>
    %58 = vector.extract_strided_slice %56 {offsets = [0, 32], sizes = [2, 32], strides = [1, 1]} : vector<2x128xf32> to vector<2x32xf32>
    %59 = vector.extract_strided_slice %56 {offsets = [0, 64], sizes = [2, 32], strides = [1, 1]} : vector<2x128xf32> to vector<2x32xf32>
    %cst_15 = arith.constant 2.000000e+00 : f32
    %60 = vector.broadcast %cst_15 : f32 to vector<2x32xf32>
    %61 = arith.mulf %60, %59 : vector<2x32xf32>
    %cst_16 = arith.constant 1.000000e+00 : f32
    %62 = vector.broadcast %cst_16 : f32 to vector<2x32xf32>
    %63 = arith.subf %61, %62 : vector<2x32xf32>
    %64 = vector.extract_strided_slice %56 {offsets = [0, 96], sizes = [2, 32], strides = [1, 1]} : vector<2x128xf32> to vector<2x32xf32>
    %65 = arith.mulf %58, %45 : vector<2x32xf32>
    %66 = arith.mulf %57, %63 : vector<2x32xf32>
    %67 = arith.addf %65, %66 : vector<2x32xf32>
    %68 = math.tanh %67 : vector<2x32xf32>
    %69 = arith.mulf %64, %68 : vector<2x32xf32>
    %70 = vector.extract_strided_slice %1 {offsets = [3, 0, 0], sizes = [1, 2, 128], strides = [1, 1, 1]} : vector<8x2x128xf32> to vector<1x2x128xf32>
    %71 = vector.shape_cast %70 : vector<1x2x128xf32> to vector<2x128xf32>
    %cst_17 = arith.constant dense<0.000000e+00> : vector<2x128xf32>
    %72 = tpu.matmul %69, %0, %cst_17 {dimension_numbers = #tpu.dot_dimension_numbers<[1], [0], [0], [1], [0, 0, 1, 1], [], []>} : vector<2x32xf32>, vector<32x128xf32>, vector<2x128xf32> -> vector<2x128xf32>
    %73 = arith.addf %71, %72 : vector<2x128xf32>
    %74 = arith.negf %73 : vector<2x128xf32>
    %75 = math.exp %74 : vector<2x128xf32>
    %cst_18 = arith.constant 1.000000e+00 : f32
    %76 = vector.broadcast %cst_18 : f32 to vector<2x128xf32>
    %77 = arith.addf %76, %75 : vector<2x128xf32>
    %78 = arith.divf %76, %77 : vector<2x128xf32>
    %79 = vector.extract_strided_slice %78 {offsets = [0, 0], sizes = [2, 32], strides = [1, 1]} : vector<2x128xf32> to vector<2x32xf32>
    %80 = vector.extract_strided_slice %78 {offsets = [0, 32], sizes = [2, 32], strides = [1, 1]} : vector<2x128xf32> to vector<2x32xf32>
    %81 = vector.extract_strided_slice %78 {offsets = [0, 64], sizes = [2, 32], strides = [1, 1]} : vector<2x128xf32> to vector<2x32xf32>
    %cst_19 = arith.constant 2.000000e+00 : f32
    %82 = vector.broadcast %cst_19 : f32 to vector<2x32xf32>
    %83 = arith.mulf %82, %81 : vector<2x32xf32>
    %cst_20 = arith.constant 1.000000e+00 : f32
    %84 = vector.broadcast %cst_20 : f32 to vector<2x32xf32>
    %85 = arith.subf %83, %84 : vector<2x32xf32>
    %86 = vector.extract_strided_slice %78 {offsets = [0, 96], sizes = [2, 32], strides = [1, 1]} : vector<2x128xf32> to vector<2x32xf32>
    %87 = arith.mulf %80, %67 : vector<2x32xf32>
    %88 = arith.mulf %79, %85 : vector<2x32xf32>
    %89 = arith.addf %87, %88 : vector<2x32xf32>
    %90 = math.tanh %89 : vector<2x32xf32>
    %91 = arith.mulf %86, %90 : vector<2x32xf32>
    %92 = tpu.concatenate %25, %47, %69, %91 in 1 : vector<2x32xf32>, vector<2x32xf32>, vector<2x32xf32>, vector<2x32xf32> -> vector<2x128xf32>
    %c0_21 = arith.constant 0 : index
    %c0_22 = arith.constant 0 : index
    %c0_23 = arith.constant 0 : index
    %93 = vector.load %arg3[%c0_21, %c0_22, %c0_23] : memref<2x2x128xf32, #tpu.memory_space<vmem>>, vector<1x2x128xf32>
    %94 = vector.shape_cast %93 : vector<1x2x128xf32> to vector<2x128xf32>
    %95 = vector.shape_cast %92 : vector<2x128xf32> to vector<1x2x128xf32>
    tpu.vector_store %arg3[%c0_21, %c0_22, %c0_23], %95 {strides = array<i32>} : memref<2x2x128xf32, #tpu.memory_space<vmem>>, vector<1x2x128xf32>,
    %96 = vector.extract_strided_slice %1 {offsets = [4, 0, 0], sizes = [1, 2, 128], strides = [1, 1, 1]} : vector<8x2x128xf32> to vector<1x2x128xf32>
    %97 = vector.shape_cast %96 : vector<1x2x128xf32> to vector<2x128xf32>
    %cst_24 = arith.constant dense<0.000000e+00> : vector<2x128xf32>
    %98 = tpu.matmul %91, %0, %cst_24 {dimension_numbers = #tpu.dot_dimension_numbers<[1], [0], [0], [1], [0, 0, 1, 1], [], []>} : vector<2x32xf32>, vector<32x128xf32>, vector<2x128xf32> -> vector<2x128xf32>
    %99 = arith.addf %97, %98 : vector<2x128xf32>
    %100 = arith.negf %99 : vector<2x128xf32>
    %101 = math.exp %100 : vector<2x128xf32>
    %cst_25 = arith.constant 1.000000e+00 : f32
    %102 = vector.broadcast %cst_25 : f32 to vector<2x128xf32>
    %103 = arith.addf %102, %101 : vector<2x128xf32>
    %104 = arith.divf %102, %103 : vector<2x128xf32>
    %105 = vector.extract_strided_slice %104 {offsets = [0, 0], sizes = [2, 32], strides = [1, 1]} : vector<2x128xf32> to vector<2x32xf32>
    %106 = vector.extract_strided_slice %104 {offsets = [0, 32], sizes = [2, 32], strides = [1, 1]} : vector<2x128xf32> to vector<2x32xf32>
    %107 = vector.extract_strided_slice %104 {offsets = [0, 64], sizes = [2, 32], strides = [1, 1]} : vector<2x128xf32> to vector<2x32xf32>
    %cst_26 = arith.constant 2.000000e+00 : f32
    %108 = vector.broadcast %cst_26 : f32 to vector<2x32xf32>
    %109 = arith.mulf %108, %107 : vector<2x32xf32>
    %cst_27 = arith.constant 1.000000e+00 : f32
    %110 = vector.broadcast %cst_27 : f32 to vector<2x32xf32>
    %111 = arith.subf %109, %110 : vector<2x32xf32>
    %112 = vector.extract_strided_slice %104 {offsets = [0, 96], sizes = [2, 32], strides = [1, 1]} : vector<2x128xf32> to vector<2x32xf32>
    %113 = arith.mulf %106, %89 : vector<2x32xf32>
    %114 = arith.mulf %105, %111 : vector<2x32xf32>
    %115 = arith.addf %113, %114 : vector<2x32xf32>
    %116 = math.tanh %115 : vector<2x32xf32>
    %117 = arith.mulf %112, %116 : vector<2x32xf32>
    %118 = vector.extract_strided_slice %1 {offsets = [5, 0, 0], sizes = [1, 2, 128], strides = [1, 1, 1]} : vector<8x2x128xf32> to vector<1x2x128xf32>
    %119 = vector.shape_cast %118 : vector<1x2x128xf32> to vector<2x128xf32>
    %cst_28 = arith.constant dense<0.000000e+00> : vector<2x128xf32>
    %120 = tpu.matmul %117, %0, %cst_28 {dimension_numbers = #tpu.dot_dimension_numbers<[1], [0], [0], [1], [0, 0, 1, 1], [], []>} : vector<2x32xf32>, vector<32x128xf32>, vector<2x128xf32> -> vector<2x128xf32>
    %121 = arith.addf %119, %120 : vector<2x128xf32>
    %122 = arith.negf %121 : vector<2x128xf32>
    %123 = math.exp %122 : vector<2x128xf32>
    %cst_29 = arith.constant 1.000000e+00 : f32
    %124 = vector.broadcast %cst_29 : f32 to vector<2x128xf32>
    %125 = arith.addf %124, %123 : vector<2x128xf32>
    %126 = arith.divf %124, %125 : vector<2x128xf32>
    %127 = vector.extract_strided_slice %126 {offsets = [0, 0], sizes = [2, 32], strides = [1, 1]} : vector<2x128xf32> to vector<2x32xf32>
    %128 = vector.extract_strided_slice %126 {offsets = [0, 32], sizes = [2, 32], strides = [1, 1]} : vector<2x128xf32> to vector<2x32xf32>
    %129 = vector.extract_strided_slice %126 {offsets = [0, 64], sizes = [2, 32], strides = [1, 1]} : vector<2x128xf32> to vector<2x32xf32>
    %cst_30 = arith.constant 2.000000e+00 : f32
    %130 = vector.broadcast %cst_30 : f32 to vector<2x32xf32>
    %131 = arith.mulf %130, %129 : vector<2x32xf32>
    %cst_31 = arith.constant 1.000000e+00 : f32
    %132 = vector.broadcast %cst_31 : f32 to vector<2x32xf32>
    %133 = arith.subf %131, %132 : vector<2x32xf32>
    %134 = vector.extract_strided_slice %126 {offsets = [0, 96], sizes = [2, 32], strides = [1, 1]} : vector<2x128xf32> to vector<2x32xf32>
    %135 = arith.mulf %128, %115 : vector<2x32xf32>
    %136 = arith.mulf %127, %133 : vector<2x32xf32>
    %137 = arith.addf %135, %136 : vector<2x32xf32>
    %138 = math.tanh %137 : vector<2x32xf32>
    %139 = arith.mulf %134, %138 : vector<2x32xf32>
    %140 = vector.extract_strided_slice %1 {offsets = [6, 0, 0], sizes = [1, 2, 128], strides = [1, 1, 1]} : vector<8x2x128xf32> to vector<1x2x128xf32>
    %141 = vector.shape_cast %140 : vector<1x2x128xf32> to vector<2x128xf32>
    %cst_32 = arith.constant dense<0.000000e+00> : vector<2x128xf32>
    %142 = tpu.matmul %139, %0, %cst_32 {dimension_numbers = #tpu.dot_dimension_numbers<[1], [0], [0], [1], [0, 0, 1, 1], [], []>} : vector<2x32xf32>, vector<32x128xf32>, vector<2x128xf32> -> vector<2x128xf32>
    %143 = arith.addf %141, %142 : vector<2x128xf32>
    %144 = arith.negf %143 : vector<2x128xf32>
    %145 = math.exp %144 : vector<2x128xf32>
    %cst_33 = arith.constant 1.000000e+00 : f32
    %146 = vector.broadcast %cst_33 : f32 to vector<2x128xf32>
    %147 = arith.addf %146, %145 : vector<2x128xf32>
    %148 = arith.divf %146, %147 : vector<2x128xf32>
    %149 = vector.extract_strided_slice %148 {offsets = [0, 0], sizes = [2, 32], strides = [1, 1]} : vector<2x128xf32> to vector<2x32xf32>
    %150 = vector.extract_strided_slice %148 {offsets = [0, 32], sizes = [2, 32], strides = [1, 1]} : vector<2x128xf32> to vector<2x32xf32>
    %151 = vector.extract_strided_slice %148 {offsets = [0, 64], sizes = [2, 32], strides = [1, 1]} : vector<2x128xf32> to vector<2x32xf32>
    %cst_34 = arith.constant 2.000000e+00 : f32
    %152 = vector.broadcast %cst_34 : f32 to vector<2x32xf32>
    %153 = arith.mulf %152, %151 : vector<2x32xf32>
    %cst_35 = arith.constant 1.000000e+00 : f32
    %154 = vector.broadcast %cst_35 : f32 to vector<2x32xf32>
    %155 = arith.subf %153, %154 : vector<2x32xf32>
    %156 = vector.extract_strided_slice %148 {offsets = [0, 96], sizes = [2, 32], strides = [1, 1]} : vector<2x128xf32> to vector<2x32xf32>
    %157 = arith.mulf %150, %137 : vector<2x32xf32>
    %158 = arith.mulf %149, %155 : vector<2x32xf32>
    %159 = arith.addf %157, %158 : vector<2x32xf32>
    %160 = math.tanh %159 : vector<2x32xf32>
    %161 = arith.mulf %156, %160 : vector<2x32xf32>
    %162 = vector.extract_strided_slice %1 {offsets = [7, 0, 0], sizes = [1, 2, 128], strides = [1, 1, 1]} : vector<8x2x128xf32> to vector<1x2x128xf32>
    %163 = vector.shape_cast %162 : vector<1x2x128xf32> to vector<2x128xf32>
    %cst_36 = arith.constant dense<0.000000e+00> : vector<2x128xf32>
    %164 = tpu.matmul %161, %0, %cst_36 {dimension_numbers = #tpu.dot_dimension_numbers<[1], [0], [0], [1], [0, 0, 1, 1], [], []>} : vector<2x32xf32>, vector<32x128xf32>, vector<2x128xf32> -> vector<2x128xf32>
    %165 = arith.addf %163, %164 : vector<2x128xf32>
    %166 = arith.negf %165 : vector<2x128xf32>
    %167 = math.exp %166 : vector<2x128xf32>
    %cst_37 = arith.constant 1.000000e+00 : f32
    %168 = vector.broadcast %cst_37 : f32 to vector<2x128xf32>
    %169 = arith.addf %168, %167 : vector<2x128xf32>
    %170 = arith.divf %168, %169 : vector<2x128xf32>
    %171 = vector.extract_strided_slice %170 {offsets = [0, 0], sizes = [2, 32], strides = [1, 1]} : vector<2x128xf32> to vector<2x32xf32>
    %172 = vector.extract_strided_slice %170 {offsets = [0, 32], sizes = [2, 32], strides = [1, 1]} : vector<2x128xf32> to vector<2x32xf32>
    %173 = vector.extract_strided_slice %170 {offsets = [0, 64], sizes = [2, 32], strides = [1, 1]} : vector<2x128xf32> to vector<2x32xf32>
    %cst_38 = arith.constant 2.000000e+00 : f32
    %174 = vector.broadcast %cst_38 : f32 to vector<2x32xf32>
    %175 = arith.mulf %174, %173 : vector<2x32xf32>
    %cst_39 = arith.constant 1.000000e+00 : f32
    %176 = vector.broadcast %cst_39 : f32 to vector<2x32xf32>
    %177 = arith.subf %175, %176 : vector<2x32xf32>
    %178 = vector.extract_strided_slice %170 {offsets = [0, 96], sizes = [2, 32], strides = [1, 1]} : vector<2x128xf32> to vector<2x32xf32>
    %179 = arith.mulf %172, %159 : vector<2x32xf32>
    %180 = arith.mulf %171, %177 : vector<2x32xf32>
    %181 = arith.addf %179, %180 : vector<2x32xf32>
    %182 = math.tanh %181 : vector<2x32xf32>
    %183 = arith.mulf %178, %182 : vector<2x32xf32>
    %184 = tpu.concatenate %117, %139, %161, %183 in 1 : vector<2x32xf32>, vector<2x32xf32>, vector<2x32xf32>, vector<2x32xf32> -> vector<2x128xf32>
    %c1 = arith.constant 1 : index
    %c0_40 = arith.constant 0 : index
    %c0_41 = arith.constant 0 : index
    %185 = vector.load %arg3[%c1, %c0_40, %c0_41] : memref<2x2x128xf32, #tpu.memory_space<vmem>>, vector<1x2x128xf32>
    %186 = vector.shape_cast %185 : vector<1x2x128xf32> to vector<2x128xf32>
    %187 = vector.shape_cast %184 : vector<2x128xf32> to vector<1x2x128xf32>
    tpu.vector_store %arg3[%c1, %c0_40, %c0_41], %187 {strides = array<i32>} : memref<2x2x128xf32, #tpu.memory_space<vmem>>, vector<1x2x128xf32>,
    %c0_42 = arith.constant 0 : index
    %c0_43 = arith.constant 0 : index
    %188 = vector.load %arg4[%c0_42, %c0_43] : memref<2x32xf32, #tpu.memory_space<vmem>>, vector<2x32xf32>
    tpu.vector_store %arg4[%c0_42, %c0_43], %183 {strides = array<i32>} : memref<2x32xf32, #tpu.memory_space<vmem>>, vector<2x32xf32>,
    %c0_44 = arith.constant 0 : index
    %c0_45 = arith.constant 0 : index
    %189 = vector.load %arg5[%c0_44, %c0_45] : memref<2x32xf32, #tpu.memory_space<vmem>>, vector<2x32xf32>
    tpu.vector_store %arg5[%c0_44, %c0_45], %181 {strides = array<i32>} : memref<2x32xf32, #tpu.memory_space<vmem>>, vector<2x32xf32>,
    return
  }
  func.func @transform_0(%arg0: i32) -> (i32, i32, i32) {
    %c0_i32 = arith.constant 0 : i32
    %c0_i32_0 = arith.constant 0 : i32
    %c0_i32_1 = arith.constant 0 : i32
    %c0_i32_2 = arith.constant 0 : i32
    return %c0_i32, %c0_i32_0, %c0_i32_1 : i32, i32, i32
  }
  func.func @transform_1(%arg0: i32) -> (i32, i32) {
    %c0_i32 = arith.constant 0 : i32
    %c0_i32_0 = arith.constant 0 : i32
    %c0_i32_1 = arith.constant 0 : i32
    return %c0_i32, %c0_i32_0 : i32, i32
  }
  func.func @transform_2(%arg0: i32) -> (i32, i32, i32) {
    %c0_i32 = arith.constant 0 : i32
    %c0_i32_0 = arith.constant 0 : i32
    %c0_i32_1 = arith.constant 0 : i32
    %c0_i32_2 = arith.constant 0 : i32
    return %c0_i32, %c0_i32_0, %c0_i32_1 : i32, i32, i32
  }
  func.func @transform_3(%arg0: i32) -> (i32, i32) {
    %c0_i32 = arith.constant 0 : i32
    %c0_i32_0 = arith.constant 0 : i32
    %c0_i32_1 = arith.constant 0 : i32
    return %c0_i32, %c0_i32_0 : i32, i32
  }
  func.func @transform_4(%arg0: i32) -> (i32, i32) {
    %c0_i32 = arith.constant 0 : i32
    %c0_i32_0 = arith.constant 0 : i32
    %c0_i32_1 = arith.constant 0 : i32
    return %c0_i32, %c0_i32_0 : i32, i32
  }
}

</mosaic_0001>

<llo_original>
// kernel: tpu_custom_call.1
$region0: #{tpu_custom_call.1}
  #allocation0 [shape = 'u32[]', space=smem, size = 0x4, offset = 0x4, fixed_abs, tag = 'smem constant byte address 0x4 - core index']
  #allocation1 [shape = 'u32[144,128]{1,0:T(1,128)}', space=vmem, size = 0x12000, scoped, tag = 'internal scratch']
  %s0 = inlined_call_operand.hbm [shape: f32[8,2,128], index: 0, kind: input, shape index: {}]
  %s1 = inlined_call_operand.hbm [shape: f32[32,128], index: 1, kind: input, shape index: {}]
  %s2 = inlined_call_operand.hbm [shape: f32[2,2,128], index: 2, kind: output, shape index: {0}]
  %s3 = inlined_call_operand.hbm [shape: f32[2,32], index: 3, kind: output, shape index: {1}]
  %s4 = inlined_call_operand.hbm [shape: f32[2,32], index: 4, kind: output, shape index: {2}]
  %5 = xla_tuple %s2, %s3, %s4
  %s6 = sld [smem:[#allocation0]]
  $region42: #{tpu_custom_call.1} parent=0
    _
  %s8 = ssub.s32 1, %s6
  %s9 = scalar_select 0, %s8, %s6
  $region1: #{tpu_custom_call.1} parent=0
    #allocation2 [shape = 'u8[8192]{0}', space=vmem, size = 0x2000, scoped, tag = 'input window, operand 0, single buffered']
    #allocation3 [shape = 's32[1]{0}', space=sflag, size = 0x4, scoped, tag = 'scoped memory for tpu_custom_call.1']
    #allocation4 [shape = 's32[1]{0}', space=sflag, size = 0x4, scoped, tag = 'scoped memory for tpu_custom_call.1']
    #allocation5 [shape = 'u8[16384]{0}', space=vmem, size = 0x4000, scoped, tag = 'input window, operand 1, single buffered']
    #allocation6 [shape = 's32[1]{0}', space=sflag, size = 0x4, scoped, tag = 'scoped memory for tpu_custom_call.1']
    #allocation7 [shape = 'u8[2048]{0}', space=vmem, size = 0x800, scoped, tag = 'output window, operand 0, single buffered']
    #allocation8 [shape = 'u8[1024]{0}', space=vmem, size = 0x400, scoped, tag = 'output window, operand 1, single buffered']
    #allocation9 [shape = 's32[1]{0}', space=sflag, size = 0x4, scoped, tag = 'scoped memory for tpu_custom_call.1']
    #allocation10 [shape = 'u8[1024]{0}', space=vmem, size = 0x400, scoped, tag = 'output window, operand 2, single buffered']
    %10 = vsyncpa [#allocation3], 0
    %11 = vsyncpa [#allocation6], 0
    %12 = vsyncpa [#allocation4], 0
    %13 = vsyncpa [#allocation9], 0
    // Predicated region
    $region2: #{tpu_custom_call.1} parent=1 // pred_check
      _
    $region3: #{tpu_custom_call.1} parent=1 // pred_check_branch
      %15 = sbr.rel (0) target = $region5
    $region4: #{tpu_custom_call.1} parent=1 // pred_region
      %s17 = ssub.s32 256, 256
      %18 = vsyncadd [#allocation3], %s17
      %s19 = sshll.u32 [#allocation2], 4
      %s20 = int_to_ptr.vmem [resolvable:$true] %s19
      %25 = dma.hbm_to_vmem [thread:$0]  %s0, 256, %s20, [#allocation3], 32, 32, 2
    $region5: #{tpu_custom_call.1} parent=1 // pred_fallthru
      _
    // Predicated region
    $region6: #{tpu_custom_call.1} parent=1 // pred_check
      _
    $region7: #{tpu_custom_call.1} parent=1 // pred_check_branch
      %27 = sbr.rel (0) target = $region9
    $region8: #{tpu_custom_call.1} parent=1 // pred_region
      %s29 = ssub.s32 512, 512
      %30 = vsyncadd [#allocation6], %s29
      %s31 = sshll.u32 [#allocation5], 4
      %s32 = int_to_ptr.vmem [resolvable:$true] %s31
      %37 = dma.hbm_to_vmem [thread:$0]  %s1, 512, %s32, [#allocation6], 128, 128, 8
    $region9: #{tpu_custom_call.1} parent=1 // pred_fallthru
      _
    // Predicated region
    $region10: #{tpu_custom_call.1} parent=1 // pred_check
      _
    $region11: #{tpu_custom_call.1} parent=1 // pred_check_branch
      %39 = sbr.rel (0) target = $region13
    $region12: #{tpu_custom_call.1} parent=1 // pred_region
      %40 = dma.done [#allocation3], 256
    $region13: #{tpu_custom_call.1} parent=1 // pred_fallthru
      _
    // Predicated region
    $region14: #{tpu_custom_call.1} parent=1 // pred_check
      _
    $region15: #{tpu_custom_call.1} parent=1 // pred_check_branch
      %42 = sbr.rel (0) target = $region17
    $region16: #{tpu_custom_call.1} parent=1 // pred_region
      %43 = dma.done [#allocation6], 512
    $region17: #{tpu_custom_call.1} parent=1 // pred_fallthru
      _
    %v44 = vld [vmem:[#allocation5] sm:$0xff]
    %v45 = vld [vmem:[#allocation5 + $0x8] sm:$0xff]
    %v46 = vld [vmem:[#allocation5 + $0x10] sm:$0xff]
    %v47 = vld [vmem:[#allocation5 + $0x18] sm:$0xff]
    %v48 = vld [vmem:[#allocation2] sm:$0x3]
    %v49 = vld [vmem:[#allocation2 + $0x2] sm:$0x3]
    %v50 = vld [vmem:[#allocation2 + $0x4] sm:$0x3]
    %v51 = vld [vmem:[#allocation2 + $0x6] sm:$0x3]
    %v52 = vld [vmem:[#allocation2 + $0x8] sm:$0x3]
    %v53 = vld [vmem:[#allocation2 + $0xa] sm:$0x3]
    %v54 = vld [vmem:[#allocation2 + $0xc] sm:$0x3]
    %v55 = vld [vmem:[#allocation2 + $0xe] sm:$0x3]
    %vm56 = vcmask 261120
    %v58 = vsel %vm56, 0.0, 0
    %60 = vmatprep.subr.mxu0 0.0
    %61 = vmatpush1.msra.mxu0 %v44
    %62 = vmatprep.subr.mxu0 0.0
    %63 = vmatpush1.msra.mxu0 %v45
    %64 = vmatprep.subr.mxu0 0.0
    %65 = vmatpush1.msra.mxu0 %v46
    %66 = vmatprep.subr.mxu0 0.0
    %67 = vmatpush1.msra.mxu0 %v47
    %68 = vmatprep.subr.mxu0 0.0
    %69 = vmatpush1.msra.mxu0 0.0
    %70 = vmatprep.subr.mxu0 0.0
    %71 = vmatpush1.msra.mxu0 0.0
    %72 = vmatprep.subr.mxu0 0.0
    %73 = vmatpush1.msra.mxu0 0.0
    %74 = vmatprep.subr.mxu0 0.0
    %75 = vmatpush1.msra.mxu0 0.0
    %76 = vmatprep.subr.mxu0 0.0
    %77 = vmatpush1.msra.mxu0 0.0
    %78 = vmatprep.subr.mxu0 0.0
    %79 = vmatpush1.msra.mxu0 0.0
    %80 = vmatprep.subr.mxu0 0.0
    %81 = vmatpush1.msra.mxu0 0.0
    %82 = vmatprep.subr.mxu0 0.0
    %83 = vmatpush1.msra.mxu0 0.0
    %84 = vmatprep.subr.mxu0 0.0
    %85 = vmatpush1.msra.mxu0 0.0
    %86 = vmatprep.subr.mxu0 0.0
    %87 = vmatpush1.msra.mxu0 0.0
    %88 = vmatprep.subr.mxu0 0.0
    %89 = vmatpush1.msra.mxu0 0.0
    %90 = vmatprep.subr.mxu0 0.0
    %91 = vmatpush1.msra.mxu0 0.0
    %92 = vmatprep.subr.mxu0 0.0
    %93 = vmatpush1.msra.mxu0 0.0
    %94 = vmatprep.subr.mxu0 0.0
    %95 = vmatpush1.msra.mxu0 0.0
    %96 = vmatprep.subr.mxu0 0.0
    %97 = vmatpush1.msra.mxu0 0.0
    %98 = vmatprep.subr.mxu0 0.0
    %99 = vmatpush1.msra.mxu0 0.0
    %100 = vmatprep.subr.mxu0 0.0
    %101 = vmatpush1.msra.mxu0 0.0
    %102 = vmatprep.subr.mxu0 0.0
    %103 = vmatpush1.msra.mxu0 0.0
    %104 = vmatprep.subr.mxu0 0.0
    %105 = vmatpush1.msra.mxu0 0.0
    %106 = vmatprep.subr.mxu0 0.0
    %107 = vmatpush1.msra.mxu0 0.0
    %108 = vmatprep.subr.mxu0 0.0
    %109 = vmatpush1.msra.mxu0 0.0
    %110 = vmatprep.subr.mxu0 0.0
    %111 = vmatpush1.msra.mxu0 0.0
    %112 = vmatprep.subr.mxu0 0.0
    %113 = vmatpush1.msra.mxu0 0.0
    %114 = vmatprep.subr.mxu0 0.0
    %115 = vmatpush1.msra.mxu0 0.0
    %116 = vmatprep.subr.mxu0 0.0
    %117 = vmatpush1.msra.mxu0 0.0
    %118 = vmatprep.subr.mxu0 0.0
    %119 = vmatpush1.msra.mxu0 0.0
    %120 = vmatprep.subr.mxu0 0.0
    %121 = vmatpush1.msra.mxu0 0.0
    %122 = vmatprep.subr.mxu0 0.0
    %123 = vmatpush1.msra.mxu0 0.0
    %124 = vmatprep.mubr.f32.mxu0 0.0
    %125 = vmatmul.mubr.f32.gmra.mrb[0].mxu0 %v58
    %v126 = vpop.f32.mrb[0].mxu0
    %v127 = vadd.f32 0.0, %v126
    %v128 = vpop.f32.mrb[0].mxu0
    %129 = vdwg.mxu0
    %v130 = vadd.f32 %v48, %v127
    %v131 = vxor.u32 %v130, 2147483648
    %v132 = vmul.f32 %v131, 1.442695
    %v133 = vpow.pop %v132
    %v134 = vadd.f32 %v133, 1.0
    %v135 = vrcp.pop %v134
    %v136 = vmul.f32 1.0, %v135
    %v137 = vmul.f32 %v136, 2.0
    %v138 = vsub.f32 %v137, 1.0
    %v139 = vmul.f32 %v136, 0.0
    %141 = vrot.lane.b32.xlu0 %v138, 64
    %v142 = vpop.permute.xlu0 %141
    %v144 = vmul.f32 %v136, %v142
    %146 = vrot.lane.b32.xlu0 %v144, 32
    %v147 = vpop.permute.xlu0 %146
    %v149 = vadd.f32 %v139, %v147
    %v150 = vtanh.pop %v149
    %152 = vrot.lane.b32.xlu0 %v150, 64
    %v153 = vpop.permute.xlu0 %152
    %v155 = vmul.f32 %v136, %v153
    %157 = vrot.lane.b32.xlu0 %v155, 32
    %v158 = vpop.permute.xlu0 %157
    %v159 = vsel %vm56, %v158, 0
    %161 = vmatprep.subr.mxu0 0.0
    %162 = vmatpush1.msra.mxu0 %v44
    %163 = vmatprep.subr.mxu0 0.0
    %164 = vmatpush1.msra.mxu0 %v45
    %165 = vmatprep.subr.mxu0 0.0
    %166 = vmatpush1.msra.mxu0 %v46
    %167 = vmatprep.subr.mxu0 0.0
    %168 = vmatpush1.msra.mxu0 %v47
    %169 = vmatprep.subr.mxu0 0.0
    %170 = vmatpush1.msra.mxu0 0.0
    %171 = vmatprep.subr.mxu0 0.0
    %172 = vmatpush1.msra.mxu0 0.0
    %173 = vmatprep.subr.mxu0 0.0
    %174 = vmatpush1.msra.mxu0 0.0
    %175 = vmatprep.subr.mxu0 0.0
    %176 = vmatpush1.msra.mxu0 0.0
    %177 = vmatprep.subr.mxu0 0.0
    %178 = vmatpush1.msra.mxu0 0.0
    %179 = vmatprep.subr.mxu0 0.0
    %180 = vmatpush1.msra.mxu0 0.0
    %181 = vmatprep.subr.mxu0 0.0
    %182 = vmatpush1.msra.mxu0 0.0
    %183 = vmatprep.subr.mxu0 0.0
    %184 = vmatpush1.msra.mxu0 0.0
    %185 = vmatprep.subr.mxu0 0.0
    %186 = vmatpush1.msra.mxu0 0.0
    %187 = vmatprep.subr.mxu0 0.0
    %188 = vmatpush1.msra.mxu0 0.0
    %189 = vmatprep.subr.mxu0 0.0
    %190 = vmatpush1.msra.mxu0 0.0
    %191 = vmatprep.subr.mxu0 0.0
    %192 = vmatpush1.msra.mxu0 0.0
    %193 = vmatprep.subr.mxu0 0.0
    %194 = vmatpush1.msra.mxu0 0.0
    %195 = vmatprep.subr.mxu0 0.0
    %196 = vmatpush1.msra.mxu0 0.0
    %197 = vmatprep.subr.mxu0 0.0
    %198 = vmatpush1.msra.mxu0 0.0
    %199 = vmatprep.subr.mxu0 0.0
    %200 = vmatpush1.msra.mxu0 0.0
    %201 = vmatprep.subr.mxu0 0.0
    %202 = vmatpush1.msra.mxu0 0.0
    %203 = vmatprep.subr.mxu0 0.0
    %204 = vmatpush1.msra.mxu0 0.0
    %205 = vmatprep.subr.mxu0 0.0
    %206 = vmatpush1.msra.mxu0 0.0
    %207 = vmatprep.subr.mxu0 0.0
    %208 = vmatpush1.msra.mxu0 0.0
    %209 = vmatprep.subr.mxu0 0.0
    %210 = vmatpush1.msra.mxu0 0.0
    %211 = vmatprep.subr.mxu0 0.0
    %212 = vmatpush1.msra.mxu0 0.0
    %213 = vmatprep.subr.mxu0 0.0
    %214 = vmatpush1.msra.mxu0 0.0
    %215 = vmatprep.subr.mxu0 0.0
    %216 = vmatpush1.msra.mxu0 0.0
    %217 = vmatprep.subr.mxu0 0.0
    %218 = vmatpush1.msra.mxu0 0.0
    %219 = vmatprep.subr.mxu0 0.0
    %220 = vmatpush1.msra.mxu0 0.0
    %221 = vmatprep.subr.mxu0 0.0
    %222 = vmatpush1.msra.mxu0 0.0
    %223 = vmatprep.subr.mxu0 0.0
    %224 = vmatpush1.msra.mxu0 0.0
    %225 = vmatprep.mubr.f32.mxu0 0.0
    %226 = vmatmul.mubr.f32.gmra.mrb[0].mxu0 %v159
    %v227 = vpop.f32.mrb[0].mxu0
    %v228 = vadd.f32 0.0, %v227
    %v229 = vpop.f32.mrb[0].mxu0
    %230 = vdwg.mxu0
    %v231 = vadd.f32 %v49, %v228
    %v232 = vxor.u32 %v231, 2147483648
    %v233 = vmul.f32 %v232, 1.442695
    %v234 = vpow.pop %v233
    %v235 = vadd.f32 %v234, 1.0
    %v236 = vrcp.pop %v235
    %v237 = vmul.f32 1.0, %v236
    %v238 = vmul.f32 %v237, 2.0
    %v239 = vsub.f32 %v238, 1.0
    %v240 = vmul.f32 %v237, %v149
    %242 = vrot.lane.b32.xlu0 %v239, 64
    %v243 = vpop.permute.xlu0 %242
    %v245 = vmul.f32 %v237, %v243
    %247 = vrot.lane.b32.xlu0 %v245, 32
    %v248 = vpop.permute.xlu0 %247
    %v250 = vadd.f32 %v240, %v248
    %v251 = vtanh.pop %v250
    %253 = vrot.lane.b32.xlu0 %v251, 64
    %v254 = vpop.permute.xlu0 %253
    %v256 = vmul.f32 %v237, %v254
    %258 = vrot.lane.b32.xlu0 %v256, 32
    %v259 = vpop.permute.xlu0 %258
    %v260 = vsel %vm56, %v259, 0
    %262 = vmatprep.subr.mxu0 0.0
    %263 = vmatpush1.msra.mxu0 %v44
    %264 = vmatprep.subr.mxu0 0.0
    %265 = vmatpush1.msra.mxu0 %v45
    %266 = vmatprep.subr.mxu0 0.0
    %267 = vmatpush1.msra.mxu0 %v46
    %268 = vmatprep.subr.mxu0 0.0
    %269 = vmatpush1.msra.mxu0 %v47
    %270 = vmatprep.subr.mxu0 0.0
    %271 = vmatpush1.msra.mxu0 0.0
    %272 = vmatprep.subr.mxu0 0.0
    %273 = vmatpush1.msra.mxu0 0.0
    %274 = vmatprep.subr.mxu0 0.0
    %275 = vmatpush1.msra.mxu0 0.0
    %276 = vmatprep.subr.mxu0 0.0
    %277 = vmatpush1.msra.mxu0 0.0
    %278 = vmatprep.subr.mxu0 0.0
    %279 = vmatpush1.msra.mxu0 0.0
    %280 = vmatprep.subr.mxu0 0.0
    %281 = vmatpush1.msra.mxu0 0.0
    %282 = vmatprep.subr.mxu0 0.0
    %283 = vmatpush1.msra.mxu0 0.0
    %284 = vmatprep.subr.mxu0 0.0
    %285 = vmatpush1.msra.mxu0 0.0
    %286 = vmatprep.subr.mxu0 0.0
    %287 = vmatpush1.msra.mxu0 0.0
    %288 = vmatprep.subr.mxu0 0.0
    %289 = vmatpush1.msra.mxu0 0.0
    %290 = vmatprep.subr.mxu0 0.0
    %291 = vmatpush1.msra.mxu0 0.0
    %292 = vmatprep.subr.mxu0 0.0
    %293 = vmatpush1.msra.mxu0 0.0
    %294 = vmatprep.subr.mxu0 0.0
    %295 = vmatpush1.msra.mxu0 0.0
    %296 = vmatprep.subr.mxu0 0.0
    %297 = vmatpush1.msra.mxu0 0.0
    %298 = vmatprep.subr.mxu0 0.0
    %299 = vmatpush1.msra.mxu0 0.0
    %300 = vmatprep.subr.mxu0 0.0
    %301 = vmatpush1.msra.mxu0 0.0
    %302 = vmatprep.subr.mxu0 0.0
    %303 = vmatpush1.msra.mxu0 0.0
    %304 = vmatprep.subr.mxu0 0.0
    %305 = vmatpush1.msra.mxu0 0.0
    %306 = vmatprep.subr.mxu0 0.0
    %307 = vmatpush1.msra.mxu0 0.0
    %308 = vmatprep.subr.mxu0 0.0
    %309 = vmatpush1.msra.mxu0 0.0
    %310 = vmatprep.subr.mxu0 0.0
    %311 = vmatpush1.msra.mxu0 0.0
    %312 = vmatprep.subr.mxu0 0.0
    %313 = vmatpush1.msra.mxu0 0.0
    %314 = vmatprep.subr.mxu0 0.0
    %315 = vmatpush1.msra.mxu0 0.0
    %316 = vmatprep.subr.mxu0 0.0
    %317 = vmatpush1.msra.mxu0 0.0
    %318 = vmatprep.subr.mxu0 0.0
    %319 = vmatpush1.msra.mxu0 0.0
    %320 = vmatprep.subr.mxu0 0.0
    %321 = vmatpush1.msra.mxu0 0.0
    %322 = vmatprep.subr.mxu0 0.0
    %323 = vmatpush1.msra.mxu0 0.0
    %324 = vmatprep.subr.mxu0 0.0
    %325 = vmatpush1.msra.mxu0 0.0
    %326 = vmatprep.mubr.f32.mxu0 0.0
    %327 = vmatmul.mubr.f32.gmra.mrb[0].mxu0 %v260
    %v328 = vpop.f32.mrb[0].mxu0
    %v329 = vadd.f32 0.0, %v328
    %v330 = vpop.f32.mrb[0].mxu0
    %331 = vdwg.mxu0
    %v332 = vadd.f32 %v50, %v329
    %v333 = vxor.u32 %v332, 2147483648
    %v334 = vmul.f32 %v333, 1.442695
    %v335 = vpow.pop %v334
    %v336 = vadd.f32 %v335, 1.0
    %v337 = vrcp.pop %v336
    %v338 = vmul.f32 1.0, %v337
    %v339 = vmul.f32 %v338, 2.0
    %v340 = vsub.f32 %v339, 1.0
    %v341 = vmul.f32 %v338, %v250
    %343 = vrot.lane.b32.xlu0 %v340, 64
    %v344 = vpop.permute.xlu0 %343
    %v346 = vmul.f32 %v338, %v344
    %348 = vrot.lane.b32.xlu0 %v346, 32
    %v349 = vpop.permute.xlu0 %348
    %v351 = vadd.f32 %v341, %v349
    %v352 = vtanh.pop %v351
    %354 = vrot.lane.b32.xlu0 %v352, 64
    %v355 = vpop.permute.xlu0 %354
    %v357 = vmul.f32 %v338, %v355
    %359 = vrot.lane.b32.xlu0 %v357, 32
    %v360 = vpop.permute.xlu0 %359
    %v361 = vsel %vm56, %v360, 0
    %363 = vmatprep.subr.mxu0 0.0
    %364 = vmatpush1.msra.mxu0 %v44
    %365 = vmatprep.subr.mxu0 0.0
    %366 = vmatpush1.msra.mxu0 %v45
    %367 = vmatprep.subr.mxu0 0.0
    %368 = vmatpush1.msra.mxu0 %v46
    %369 = vmatprep.subr.mxu0 0.0
    %370 = vmatpush1.msra.mxu0 %v47
    %371 = vmatprep.subr.mxu0 0.0
    %372 = vmatpush1.msra.mxu0 0.0
    %373 = vmatprep.subr.mxu0 0.0
    %374 = vmatpush1.msra.mxu0 0.0
    %375 = vmatprep.subr.mxu0 0.0
    %376 = vmatpush1.msra.mxu0 0.0
    %377 = vmatprep.subr.mxu0 0.0
    %378 = vmatpush1.msra.mxu0 0.0
    %379 = vmatprep.subr.mxu0 0.0
    %380 = vmatpush1.msra.mxu0 0.0
    %381 = vmatprep.subr.mxu0 0.0
    %382 = vmatpush1.msra.mxu0 0.0
    %383 = vmatprep.subr.mxu0 0.0
    %384 = vmatpush1.msra.mxu0 0.0
    %385 = vmatprep.subr.mxu0 0.0
    %386 = vmatpush1.msra.mxu0 0.0
    %387 = vmatprep.subr.mxu0 0.0
    %388 = vmatpush1.msra.mxu0 0.0
    %389 = vmatprep.subr.mxu0 0.0
    %390 = vmatpush1.msra.mxu0 0.0
    %391 = vmatprep.subr.mxu0 0.0
    %392 = vmatpush1.msra.mxu0 0.0
    %393 = vmatprep.subr.mxu0 0.0
    %394 = vmatpush1.msra.mxu0 0.0
    %395 = vmatprep.subr.mxu0 0.0
    %396 = vmatpush1.msra.mxu0 0.0
    %397 = vmatprep.subr.mxu0 0.0
    %398 = vmatpush1.msra.mxu0 0.0
    %399 = vmatprep.subr.mxu0 0.0
    %400 = vmatpush1.msra.mxu0 0.0
    %401 = vmatprep.subr.mxu0 0.0
    %402 = vmatpush1.msra.mxu0 0.0
    %403 = vmatprep.subr.mxu0 0.0
    %404 = vmatpush1.msra.mxu0 0.0
    %405 = vmatprep.subr.mxu0 0.0
    %406 = vmatpush1.msra.mxu0 0.0
    %407 = vmatprep.subr.mxu0 0.0
    %408 = vmatpush1.msra.mxu0 0.0
    %409 = vmatprep.subr.mxu0 0.0
    %410 = vmatpush1.msra.mxu0 0.0
    %411 = vmatprep.subr.mxu0 0.0
    %412 = vmatpush1.msra.mxu0 0.0
    %413 = vmatprep.subr.mxu0 0.0
    %414 = vmatpush1.msra.mxu0 0.0
    %415 = vmatprep.subr.mxu0 0.0
    %416 = vmatpush1.msra.mxu0 0.0
    %417 = vmatprep.subr.mxu0 0.0
    %418 = vmatpush1.msra.mxu0 0.0
    %419 = vmatprep.subr.mxu0 0.0
    %420 = vmatpush1.msra.mxu0 0.0
    %421 = vmatprep.subr.mxu0 0.0
    %422 = vmatpush1.msra.mxu0 0.0
    %423 = vmatprep.subr.mxu0 0.0
    %424 = vmatpush1.msra.mxu0 0.0
    %425 = vmatprep.subr.mxu0 0.0
    %426 = vmatpush1.msra.mxu0 0.0
    %427 = vmatprep.mubr.f32.mxu0 0.0
    %428 = vmatmul.mubr.f32.gmra.mrb[0].mxu0 %v361
    %v429 = vpop.f32.mrb[0].mxu0
    %v430 = vadd.f32 0.0, %v429
    %v431 = vpop.f32.mrb[0].mxu0
    %432 = vdwg.mxu0
    %v433 = vadd.f32 %v51, %v430
    %v434 = vxor.u32 %v433, 2147483648
    %v435 = vmul.f32 %v434, 1.442695
    %v436 = vpow.pop %v435
    %v437 = vadd.f32 %v436, 1.0
    %v438 = vrcp.pop %v437
    %v439 = vmul.f32 1.0, %v438
    %v440 = vmul.f32 %v439, 2.0
    %v441 = vsub.f32 %v440, 1.0
    %v442 = vmul.f32 %v439, %v351
    %444 = vrot.lane.b32.xlu0 %v441, 64
    %v445 = vpop.permute.xlu0 %444
    %v447 = vmul.f32 %v439, %v445
    %449 = vrot.lane.b32.xlu0 %v447, 32
    %v450 = vpop.permute.xlu0 %449
    %v452 = vadd.f32 %v442, %v450
    %v453 = vtanh.pop %v452
    %455 = vrot.lane.b32.xlu0 %v453, 64
    %v456 = vpop.permute.xlu0 %455
    %v458 = vmul.f32 %v439, %v456
    %460 = vrot.lane.b32.xlu0 %v256, 64
    %v461 = vpop.permute.xlu0 %460
    %463 = vrot.lane.b32.xlu0 %v357, 96
    %v464 = vpop.permute.xlu0 %463
    %v466 = vsel %vm56, %v158, %v461
    %vm467 = vcmask 523264
    %v468 = vsel %vm467, %v466, %v464
    %vm469 = vcmask 785408
    %v470 = vsel %vm469, %v468, %v458
    %471 = vst [vmem:[#allocation7] sm:$0x3] %v470
    %473 = vrot.lane.b32.xlu0 %v458, 32
    %v474 = vpop.permute.xlu0 %473
    %v475 = vsel %vm56, %v474, 0
    %477 = vmatprep.subr.mxu0 0.0
    %478 = vmatpush1.msra.mxu0 %v44
    %479 = vmatprep.subr.mxu0 0.0
    %480 = vmatpush1.msra.mxu0 %v45
    %481 = vmatprep.subr.mxu0 0.0
    %482 = vmatpush1.msra.mxu0 %v46
    %483 = vmatprep.subr.mxu0 0.0
    %484 = vmatpush1.msra.mxu0 %v47
    %485 = vmatprep.subr.mxu0 0.0
    %486 = vmatpush1.msra.mxu0 0.0
    %487 = vmatprep.subr.mxu0 0.0
    %488 = vmatpush1.msra.mxu0 0.0
    %489 = vmatprep.subr.mxu0 0.0
    %490 = vmatpush1.msra.mxu0 0.0
    %491 = vmatprep.subr.mxu0 0.0
    %492 = vmatpush1.msra.mxu0 0.0
    %493 = vmatprep.subr.mxu0 0.0
    %494 = vmatpush1.msra.mxu0 0.0
    %495 = vmatprep.subr.mxu0 0.0
    %496 = vmatpush1.msra.mxu0 0.0
    %497 = vmatprep.subr.mxu0 0.0
    %498 = vmatpush1.msra.mxu0 0.0
    %499 = vmatprep.subr.mxu0 0.0
    %500 = vmatpush1.msra.mxu0 0.0
    %501 = vmatprep.subr.mxu0 0.0
    %502 = vmatpush1.msra.mxu0 0.0
    %503 = vmatprep.subr.mxu0 0.0
    %504 = vmatpush1.msra.mxu0 0.0
    %505 = vmatprep.subr.mxu0 0.0
    %506 = vmatpush1.msra.mxu0 0.0
    %507 = vmatprep.subr.mxu0 0.0
    %508 = vmatpush1.msra.mxu0 0.0
    %509 = vmatprep.subr.mxu0 0.0
    %510 = vmatpush1.msra.mxu0 0.0
    %511 = vmatprep.subr.mxu0 0.0
    %512 = vmatpush1.msra.mxu0 0.0
    %513 = vmatprep.subr.mxu0 0.0
    %514 = vmatpush1.msra.mxu0 0.0
    %515 = vmatprep.subr.mxu0 0.0
    %516 = vmatpush1.msra.mxu0 0.0
    %517 = vmatprep.subr.mxu0 0.0
    %518 = vmatpush1.msra.mxu0 0.0
    %519 = vmatprep.subr.mxu0 0.0
    %520 = vmatpush1.msra.mxu0 0.0
    %521 = vmatprep.subr.mxu0 0.0
    %522 = vmatpush1.msra.mxu0 0.0
    %523 = vmatprep.subr.mxu0 0.0
    %524 = vmatpush1.msra.mxu0 0.0
    %525 = vmatprep.subr.mxu0 0.0
    %526 = vmatpush1.msra.mxu0 0.0
    %527 = vmatprep.subr.mxu0 0.0
    %528 = vmatpush1.msra.mxu0 0.0
    %529 = vmatprep.subr.mxu0 0.0
    %530 = vmatpush1.msra.mxu0 0.0
    %531 = vmatprep.subr.mxu0 0.0
    %532 = vmatpush1.msra.mxu0 0.0
    %533 = vmatprep.subr.mxu0 0.0
    %534 = vmatpush1.msra.mxu0 0.0
    %535 = vmatprep.subr.mxu0 0.0
    %536 = vmatpush1.msra.mxu0 0.0
    %537 = vmatprep.subr.mxu0 0.0
    %538 = vmatpush1.msra.mxu0 0.0
    %539 = vmatprep.subr.mxu0 0.0
    %540 = vmatpush1.msra.mxu0 0.0
    %541 = vmatprep.mubr.f32.mxu0 0.0
    %542 = vmatmul.mubr.f32.gmra.mrb[0].mxu0 %v475
    %v543 = vpop.f32.mrb[0].mxu0
    %v544 = vadd.f32 0.0, %v543
    %v545 = vpop.f32.mrb[0].mxu0
    %546 = vdwg.mxu0
    %v547 = vadd.f32 %v52, %v544
    %v548 = vxor.u32 %v547, 2147483648
    %v549 = vmul.f32 %v548, 1.442695
    %v550 = vpow.pop %v549
    %v551 = vadd.f32 %v550, 1.0
    %v552 = vrcp.pop %v551
    %v553 = vmul.f32 1.0, %v552
    %v554 = vmul.f32 %v553, 2.0
    %v555 = vsub.f32 %v554, 1.0
    %v556 = vmul.f32 %v553, %v452
    %558 = vrot.lane.b32.xlu0 %v555, 64
    %v559 = vpop.permute.xlu0 %558
    %v561 = vmul.f32 %v553, %v559
    %563 = vrot.lane.b32.xlu0 %v561, 32
    %v564 = vpop.permute.xlu0 %563
    %v566 = vadd.f32 %v556, %v564
    %v567 = vtanh.pop %v566
    %569 = vrot.lane.b32.xlu0 %v567, 64
    %v570 = vpop.permute.xlu0 %569
    %v572 = vmul.f32 %v553, %v570
    %574 = vrot.lane.b32.xlu0 %v572, 32
    %v575 = vpop.permute.xlu0 %574
    %v576 = vsel %vm56, %v575, 0
    %578 = vmatprep.subr.mxu0 0.0
    %579 = vmatpush1.msra.mxu0 %v44
    %580 = vmatprep.subr.mxu0 0.0
    %581 = vmatpush1.msra.mxu0 %v45
    %582 = vmatprep.subr.mxu0 0.0
    %583 = vmatpush1.msra.mxu0 %v46
    %584 = vmatprep.subr.mxu0 0.0
    %585 = vmatpush1.msra.mxu0 %v47
    %586 = vmatprep.subr.mxu0 0.0
    %587 = vmatpush1.msra.mxu0 0.0
    %588 = vmatprep.subr.mxu0 0.0
    %589 = vmatpush1.msra.mxu0 0.0
    %590 = vmatprep.subr.mxu0 0.0
    %591 = vmatpush1.msra.mxu0 0.0
    %592 = vmatprep.subr.mxu0 0.0
    %593 = vmatpush1.msra.mxu0 0.0
    %594 = vmatprep.subr.mxu0 0.0
    %595 = vmatpush1.msra.mxu0 0.0
    %596 = vmatprep.subr.mxu0 0.0
    %597 = vmatpush1.msra.mxu0 0.0
    %598 = vmatprep.subr.mxu0 0.0
    %599 = vmatpush1.msra.mxu0 0.0
    %600 = vmatprep.subr.mxu0 0.0
    %601 = vmatpush1.msra.mxu0 0.0
    %602 = vmatprep.subr.mxu0 0.0
    %603 = vmatpush1.msra.mxu0 0.0
    %604 = vmatprep.subr.mxu0 0.0
    %605 = vmatpush1.msra.mxu0 0.0
    %606 = vmatprep.subr.mxu0 0.0
    %607 = vmatpush1.msra.mxu0 0.0
    %608 = vmatprep.subr.mxu0 0.0
    %609 = vmatpush1.msra.mxu0 0.0
    %610 = vmatprep.subr.mxu0 0.0
    %611 = vmatpush1.msra.mxu0 0.0
    %612 = vmatprep.subr.mxu0 0.0
    %613 = vmatpush1.msra.mxu0 0.0
    %614 = vmatprep.subr.mxu0 0.0
    %615 = vmatpush1.msra.mxu0 0.0
    %616 = vmatprep.subr.mxu0 0.0
    %617 = vmatpush1.msra.mxu0 0.0
    %618 = vmatprep.subr.mxu0 0.0
    %619 = vmatpush1.msra.mxu0 0.0
    %620 = vmatprep.subr.mxu0 0.0
    %621 = vmatpush1.msra.mxu0 0.0
    %622 = vmatprep.subr.mxu0 0.0
    %623 = vmatpush1.msra.mxu0 0.0
    %624 = vmatprep.subr.mxu0 0.0
    %625 = vmatpush1.msra.mxu0 0.0
    %626 = vmatprep.subr.mxu0 0.0
    %627 = vmatpush1.msra.mxu0 0.0
    %628 = vmatprep.subr.mxu0 0.0
    %629 = vmatpush1.msra.mxu0 0.0
    %630 = vmatprep.subr.mxu0 0.0
    %631 = vmatpush1.msra.mxu0 0.0
    %632 = vmatprep.subr.mxu0 0.0
    %633 = vmatpush1.msra.mxu0 0.0
    %634 = vmatprep.subr.mxu0 0.0
    %635 = vmatpush1.msra.mxu0 0.0
    %636 = vmatprep.subr.mxu0 0.0
    %637 = vmatpush1.msra.mxu0 0.0
    %638 = vmatprep.subr.mxu0 0.0
    %639 = vmatpush1.msra.mxu0 0.0
    %640 = vmatprep.subr.mxu0 0.0
    %641 = vmatpush1.msra.mxu0 0.0
    %642 = vmatprep.mubr.f32.mxu0 0.0
    %643 = vmatmul.mubr.f32.gmra.mrb[0].mxu0 %v576
    %v644 = vpop.f32.mrb[0].mxu0
    %v645 = vadd.f32 0.0, %v644
    %v646 = vpop.f32.mrb[0].mxu0
    %647 = vdwg.mxu0
    %v648 = vadd.f32 %v53, %v645
    %v649 = vxor.u32 %v648, 2147483648
    %v650 = vmul.f32 %v649, 1.442695
    %v651 = vpow.pop %v650
    %v652 = vadd.f32 %v651, 1.0
    %v653 = vrcp.pop %v652
    %v654 = vmul.f32 1.0, %v653
    %v655 = vmul.f32 %v654, 2.0
    %v656 = vsub.f32 %v655, 1.0
    %v657 = vmul.f32 %v654, %v566
    %659 = vrot.lane.b32.xlu0 %v656, 64
    %v660 = vpop.permute.xlu0 %659
    %v662 = vmul.f32 %v654, %v660
    %664 = vrot.lane.b32.xlu0 %v662, 32
    %v665 = vpop.permute.xlu0 %664
    %v667 = vadd.f32 %v657, %v665
    %v668 = vtanh.pop %v667
    %670 = vrot.lane.b32.xlu0 %v668, 64
    %v671 = vpop.permute.xlu0 %670
    %v673 = vmul.f32 %v654, %v671
    %675 = vrot.lane.b32.xlu0 %v673, 32
    %v676 = vpop.permute.xlu0 %675
    %v677 = vsel %vm56, %v676, 0
    %679 = vmatprep.subr.mxu0 0.0
    %680 = vmatpush1.msra.mxu0 %v44
    %681 = vmatprep.subr.mxu0 0.0
    %682 = vmatpush1.msra.mxu0 %v45
    %683 = vmatprep.subr.mxu0 0.0
    %684 = vmatpush1.msra.mxu0 %v46
    %685 = vmatprep.subr.mxu0 0.0
    %686 = vmatpush1.msra.mxu0 %v47
    %687 = vmatprep.subr.mxu0 0.0
    %688 = vmatpush1.msra.mxu0 0.0
    %689 = vmatprep.subr.mxu0 0.0
    %690 = vmatpush1.msra.mxu0 0.0
    %691 = vmatprep.subr.mxu0 0.0
    %692 = vmatpush1.msra.mxu0 0.0
    %693 = vmatprep.subr.mxu0 0.0
    %694 = vmatpush1.msra.mxu0 0.0
    %695 = vmatprep.subr.mxu0 0.0
    %696 = vmatpush1.msra.mxu0 0.0
    %697 = vmatprep.subr.mxu0 0.0
    %698 = vmatpush1.msra.mxu0 0.0
    %699 = vmatprep.subr.mxu0 0.0
    %700 = vmatpush1.msra.mxu0 0.0
    %701 = vmatprep.subr.mxu0 0.0
    %702 = vmatpush1.msra.mxu0 0.0
    %703 = vmatprep.subr.mxu0 0.0
    %704 = vmatpush1.msra.mxu0 0.0
    %705 = vmatprep.subr.mxu0 0.0
    %706 = vmatpush1.msra.mxu0 0.0
    %707 = vmatprep.subr.mxu0 0.0
    %708 = vmatpush1.msra.mxu0 0.0
    %709 = vmatprep.subr.mxu0 0.0
    %710 = vmatpush1.msra.mxu0 0.0
    %711 = vmatprep.subr.mxu0 0.0
    %712 = vmatpush1.msra.mxu0 0.0
    %713 = vmatprep.subr.mxu0 0.0
    %714 = vmatpush1.msra.mxu0 0.0
    %715 = vmatprep.subr.mxu0 0.0
    %716 = vmatpush1.msra.mxu0 0.0
    %717 = vmatprep.subr.mxu0 0.0
    %718 = vmatpush1.msra.mxu0 0.0
    %719 = vmatprep.subr.mxu0 0.0
    %720 = vmatpush1.msra.mxu0 0.0
    %721 = vmatprep.subr.mxu0 0.0
    %722 = vmatpush1.msra.mxu0 0.0
    %723 = vmatprep.subr.mxu0 0.0
    %724 = vmatpush1.msra.mxu0 0.0
    %725 = vmatprep.subr.mxu0 0.0
    %726 = vmatpush1.msra.mxu0 0.0
    %727 = vmatprep.subr.mxu0 0.0
    %728 = vmatpush1.msra.mxu0 0.0
    %729 = vmatprep.subr.mxu0 0.0
    %730 = vmatpush1.msra.mxu0 0.0
    %731 = vmatprep.subr.mxu0 0.0
    %732 = vmatpush1.msra.mxu0 0.0
    %733 = vmatprep.subr.mxu0 0.0
    %734 = vmatpush1.msra.mxu0 0.0
    %735 = vmatprep.subr.mxu0 0.0
    %736 = vmatpush1.msra.mxu0 0.0
    %737 = vmatprep.subr.mxu0 0.0
    %738 = vmatpush1.msra.mxu0 0.0
    %739 = vmatprep.subr.mxu0 0.0
    %740 = vmatpush1.msra.mxu0 0.0
    %741 = vmatprep.subr.mxu0 0.0
    %742 = vmatpush1.msra.mxu0 0.0
    %743 = vmatprep.mubr.f32.mxu0 0.0
    %744 = vmatmul.mubr.f32.gmra.mrb[0].mxu0 %v677
    %v745 = vpop.f32.mrb[0].mxu0
    %v746 = vadd.f32 0.0, %v745
    %v747 = vpop.f32.mrb[0].mxu0
    %748 = vdwg.mxu0
    %v749 = vadd.f32 %v54, %v746
    %v750 = vxor.u32 %v749, 2147483648
    %v751 = vmul.f32 %v750, 1.442695
    %v752 = vpow.pop %v751
    %v753 = vadd.f32 %v752, 1.0
    %v754 = vrcp.pop %v753
    %v755 = vmul.f32 1.0, %v754
    %v756 = vmul.f32 %v755, 2.0
    %v757 = vsub.f32 %v756, 1.0
    %v758 = vmul.f32 %v755, %v667
    %760 = vrot.lane.b32.xlu0 %v757, 64
    %v761 = vpop.permute.xlu0 %760
    %v763 = vmul.f32 %v755, %v761
    %765 = vrot.lane.b32.xlu0 %v763, 32
    %v766 = vpop.permute.xlu0 %765
    %v768 = vadd.f32 %v758, %v766
    %v769 = vtanh.pop %v768
    %771 = vrot.lane.b32.xlu0 %v769, 64
    %v772 = vpop.permute.xlu0 %771
    %v774 = vmul.f32 %v755, %v772
    %776 = vrot.lane.b32.xlu0 %v774, 32
    %v777 = vpop.permute.xlu0 %776
    %v778 = vsel %vm56, %v777, 0
    %780 = vmatprep.subr.mxu0 0.0
    %781 = vmatpush1.msra.mxu0 %v44
    %782 = vmatprep.subr.mxu0 0.0
    %783 = vmatpush1.msra.mxu0 %v45
    %784 = vmatprep.subr.mxu0 0.0
    %785 = vmatpush1.msra.mxu0 %v46
    %786 = vmatprep.subr.mxu0 0.0
    %787 = vmatpush1.msra.mxu0 %v47
    %788 = vmatprep.subr.mxu0 0.0
    %789 = vmatpush1.msra.mxu0 0.0
    %790 = vmatprep.subr.mxu0 0.0
    %791 = vmatpush1.msra.mxu0 0.0
    %792 = vmatprep.subr.mxu0 0.0
    %793 = vmatpush1.msra.mxu0 0.0
    %794 = vmatprep.subr.mxu0 0.0
    %795 = vmatpush1.msra.mxu0 0.0
    %796 = vmatprep.subr.mxu0 0.0
    %797 = vmatpush1.msra.mxu0 0.0
    %798 = vmatprep.subr.mxu0 0.0
    %799 = vmatpush1.msra.mxu0 0.0
    %800 = vmatprep.subr.mxu0 0.0
    %801 = vmatpush1.msra.mxu0 0.0
    %802 = vmatprep.subr.mxu0 0.0
    %803 = vmatpush1.msra.mxu0 0.0
    %804 = vmatprep.subr.mxu0 0.0
    %805 = vmatpush1.msra.mxu0 0.0
    %806 = vmatprep.subr.mxu0 0.0
    %807 = vmatpush1.msra.mxu0 0.0
    %808 = vmatprep.subr.mxu0 0.0
    %809 = vmatpush1.msra.mxu0 0.0
    %810 = vmatprep.subr.mxu0 0.0
    %811 = vmatpush1.msra.mxu0 0.0
    %812 = vmatprep.subr.mxu0 0.0
    %813 = vmatpush1.msra.mxu0 0.0
    %814 = vmatprep.subr.mxu0 0.0
    %815 = vmatpush1.msra.mxu0 0.0
    %816 = vmatprep.subr.mxu0 0.0
    %817 = vmatpush1.msra.mxu0 0.0
    %818 = vmatprep.subr.mxu0 0.0
    %819 = vmatpush1.msra.mxu0 0.0
    %820 = vmatprep.subr.mxu0 0.0
    %821 = vmatpush1.msra.mxu0 0.0
    %822 = vmatprep.subr.mxu0 0.0
    %823 = vmatpush1.msra.mxu0 0.0
    %824 = vmatprep.subr.mxu0 0.0
    %825 = vmatpush1.msra.mxu0 0.0
    %826 = vmatprep.subr.mxu0 0.0
    %827 = vmatpush1.msra.mxu0 0.0
    %828 = vmatprep.subr.mxu0 0.0
    %829 = vmatpush1.msra.mxu0 0.0
    %830 = vmatprep.subr.mxu0 0.0
    %831 = vmatpush1.msra.mxu0 0.0
    %832 = vmatprep.subr.mxu0 0.0
    %833 = vmatpush1.msra.mxu0 0.0
    %834 = vmatprep.subr.mxu0 0.0
    %835 = vmatpush1.msra.mxu0 0.0
    %836 = vmatprep.subr.mxu0 0.0
    %837 = vmatpush1.msra.mxu0 0.0
    %838 = vmatprep.subr.mxu0 0.0
    %839 = vmatpush1.msra.mxu0 0.0
    %840 = vmatprep.subr.mxu0 0.0
    %841 = vmatpush1.msra.mxu0 0.0
    %842 = vmatprep.subr.mxu0 0.0
    %843 = vmatpush1.msra.mxu0 0.0
    %844 = vmatprep.mubr.f32.mxu0 0.0
    %845 = vmatmul.mubr.f32.gmra.mrb[0].mxu0 %v778
    %v846 = vpop.f32.mrb[0].mxu0
    %v847 = vadd.f32 0.0, %v846
    %v848 = vpop.f32.mrb[0].mxu0
    %849 = vdwg.mxu0
    %v850 = vadd.f32 %v55, %v847
    %v851 = vxor.u32 %v850, 2147483648
    %v852 = vmul.f32 %v851, 1.442695
    %v853 = vpow.pop %v852
    %v854 = vadd.f32 %v853, 1.0
    %v855 = vrcp.pop %v854
    %v856 = vmul.f32 1.0, %v855
    %v857 = vmul.f32 %v856, 2.0
    %v858 = vsub.f32 %v857, 1.0
    %v859 = vmul.f32 %v856, %v768
    %861 = vrot.lane.b32.xlu0 %v858, 64
    %v862 = vpop.permute.xlu0 %861
    %v864 = vmul.f32 %v856, %v862
    %866 = vrot.lane.b32.xlu0 %v864, 32
    %v867 = vpop.permute.xlu0 %866
    %v869 = vadd.f32 %v859, %v867
    %v870 = vtanh.pop %v869
    %872 = vrot.lane.b32.xlu0 %v870, 64
    %v873 = vpop.permute.xlu0 %872
    %v875 = vmul.f32 %v856, %v873
    %877 = vrot.lane.b32.xlu0 %v673, 64
    %v878 = vpop.permute.xlu0 %877
    %880 = vrot.lane.b32.xlu0 %v774, 96
    %v881 = vpop.permute.xlu0 %880
    %v883 = vsel %vm56, %v575, %v878
    %v884 = vsel %vm467, %v883, %v881
    %v885 = vsel %vm469, %v884, %v875
    %s886 = scalar_lea.vmem [#allocation7], 2
    %887 = vst [vmem:[%s886] sm:$0x3] %v885
    %889 = vrot.lane.b32.xlu0 %v875, 32
    %v890 = vpop.permute.xlu0 %889
    %vm892 = vcmask 254976
    %893 = vst.msk [vmem:[#allocation8] sm:$0x3] %vm892, %v890
    %895 = vrot.lane.b32.xlu0 %v869, 96
    %v896 = vpop.permute.xlu0 %895
    %898 = vst.msk [vmem:[#allocation10] sm:$0x3] %vm892, %v896
    // Predicated region
    $region18: #{tpu_custom_call.1} parent=1 // pred_check
      _
    $region19: #{tpu_custom_call.1} parent=1 // pred_check_branch
      %900 = sbr.rel (0) target = $region21
    $region20: #{tpu_custom_call.1} parent=1 // pred_region
      %s902 = ssub.s32 64, 64
      %903 = vsyncadd [#allocation4], %s902
      %s904 = sshll.u32 [#allocation7], 4
      %s905 = int_to_ptr.vmem [resolvable:$true] %s904
      %910 = dma.vmem_to_hbm [thread:$0]  %s905, 64, %s2, [#allocation4], 32, 32, 2
    $region21: #{tpu_custom_call.1} parent=1 // pred_fallthru
      _
    // Predicated region
    $region22: #{tpu_custom_call.1} parent=1 // pred_check
      _
    $region23: #{tpu_custom_call.1} parent=1 // pred_check_branch
      %912 = sbr.rel (0) target = $region25
    $region24: #{tpu_custom_call.1} parent=1 // pred_region
      %s914 = ssub.s32 32, 32
      %915 = vsyncadd [#allocation9], %s914
      %s917 = sshll.u32 [#allocation8], 4
      %s918 = int_to_ptr.vmem [resolvable:$true] %s917
      %920 = dma.vmem_to_hbm [thread:$0]  %s918, 32, %s3, [#allocation9]
    $region25: #{tpu_custom_call.1} parent=1 // pred_fallthru
      _
    // Predicated region
    $region26: #{tpu_custom_call.1} parent=1 // pred_check
      _
    $region27: #{tpu_custom_call.1} parent=1 // pred_check_branch
      %922 = sbr.rel (0) target = $region29
    $region28: #{tpu_custom_call.1} parent=1 // pred_region
      %s924 = ssub.s32 32, 32
      %925 = vsyncadd [#allocation9], %s924
      %s927 = sshll.u32 [#allocation10], 4
      %s928 = int_to_ptr.vmem [resolvable:$true] %s927
      %930 = dma.vmem_to_hbm [thread:$0]  %s928, 32, %s4, [#allocation9]
    $region29: #{tpu_custom_call.1} parent=1 // pred_fallthru
      _
    // Predicated region
    $region30: #{tpu_custom_call.1} parent=1 // pred_check
      _
    $region31: #{tpu_custom_call.1} parent=1 // pred_check_branch
      %932 = sbr.rel (0) target = $region33
    $region32: #{tpu_custom_call.1} parent=1 // pred_region
      %933 = dma.done [#allocation4], 64
    $region33: #{tpu_custom_call.1} parent=1 // pred_fallthru
      _
    // Predicated region
    $region34: #{tpu_custom_call.1} parent=1 // pred_check
      _
    $region35: #{tpu_custom_call.1} parent=1 // pred_check_branch
      %935 = sbr.rel (0) target = $region37
    $region36: #{tpu_custom_call.1} parent=1 // pred_region
      %936 = dma.done [#allocation9], 32
    $region37: #{tpu_custom_call.1} parent=1 // pred_fallthru
      _
    // Predicated region
    $region38: #{tpu_custom_call.1} parent=1 // pred_check
      _
    $region39: #{tpu_custom_call.1} parent=1 // pred_check_branch
      %938 = sbr.rel (0) target = $region41
    $region40: #{tpu_custom_call.1} parent=1 // pred_region
      %939 = dma.done [#allocation9], 32
    $region41: #{tpu_custom_call.1} parent=1 // pred_fallthru
      _
    %940 = vsyncpa [#allocation3], 1
    %941 = vsyncpa [#allocation6], 1
    %942 = vsyncpa [#allocation4], 1
    %943 = vsyncpa [#allocation9], 1

</llo_original>
